<compile_context>
chip_gen: v5e
topology: v5e:2x2
jax: 0.10.0
libtpu: 0.0.40
codegen_flags: <defaults>
</compile_context>

<pallas_src>
import functools

import jax
import jax.numpy as jnp
import numpy as np
from jax.experimental import pallas as pl
from jax.experimental.pallas import tpu as pltpu


def _round_up(a, b):
    return (a + b - 1) // b * b


# ----------------------------- Pallas kernel ------------------------------

def _rep_block_kernel(w_ref, b_ref, xa_ref, xb_ref, o_ref, *, offsets):
    # w_ref : (n_off, C_out, R)   per-lane-offset weight matrices (R = P*C_in)
    # b_ref : (C_out, 1)          fused bias
    # xa_ref: (R, TL)             lane tile of the phase-split, batch-fused input
    # xb_ref: (R, HB)             halo tile (next HB columns)
    # o_ref : (C_out, TL)
    tl = o_ref.shape[-1]
    x = jnp.concatenate([xa_ref[...], xb_ref[...]], axis=-1)   # (R, TL+HB)
    acc = None
    for i, off in enumerate(offsets):
        xs = x[:, off:off + tl]                                # lane-shifted window
        c = jnp.dot(w_ref[i], xs, preferred_element_type=jnp.float32)
        acc = c if acc is None else acc + c
    acc = acc + b_ref[...]
    o_ref[...] = jnp.maximum(acc, 0.0).astype(o_ref.dtype)


def rep_block_pallas(x, w_prime, b_prime, w_1x1, b_1x1, *, dilation, stride,
                     lane_tile=8192):
    """One Rep_1d_block: relu(conv_K(x) + conv_1x1(x)), both with `stride`."""
    N, C_in, L = x.shape
    C_out, _, K = w_prime.shape
    assert K % 2 == 1, "1x1-branch fold assumes an odd prime kernel size"
    d, s = dilation, stride
    pad = d * (K - 1) // 2
    L_out = (L + 2 * pad - d * (K - 1) - 1) // s + 1

    # --- re-parameterization: fold 1x1 branch into the center tap ----------
    w_eq = w_prime.at[:, :, (K - 1) // 2].add(w_1x1[:, :, 0])  # (C_out,C_in,K)
    b_eq = (b_prime + b_1x1).reshape(C_out, 1)

    # --- phase decomposition of the strided/dilated conv -------------------
    phases = sorted(set((k * d) % s for k in range(K)))
    ph_pos = {p: i for i, p in enumerate(phases)}
    offs = sorted(set((k * d) // s for k in range(K)))
    off_pos = {o: i for i, o in enumerate(offs)}
    P, n_off = len(phases), len(offs)
    R = P * C_in
    max_off = max(offs)

    # --- tiling geometry (batch folded into the lane axis) -----------------
    HB = max(128, _round_up(max(max_off, 1), 128))       # halo block width
    L_out_p = _round_up(L_out + max_off, 128)            # per-batch segment
    Mp = N * L_out_p
    TL = max(HB, min(lane_tile, Mp))
    TL = _round_up(TL, HB)
    num_tiles = pl.cdiv(Mp, TL)
    Mp_pad = num_tiles * TL

    # --- per-offset weight matrices (tiny, glue) ----------------------------
    # Wo[co, p_k*C_in + c] += w_eq[co, c, k]  for taps k with off_k == o
    w_stack = jnp.zeros((n_off, C_out, R), jnp.float32)
    for k in range(K):
        o_i = off_pos[(k * d) // s]
        p_i = ph_pos[(k * d) % s]
        w_stack = w_stack.at[o_i, :, p_i * C_in:(p_i + 1) * C_in].add(
            w_eq[:, :, k])

    # --- phase-split, batch-fused input (1x traffic, no K expansion) --------
    # X2[p*C_in + c, n*L_out_p + u] = x_pad[n, c, u*s + phases[p]]
    target_in = L_out_p * s
    xp = jnp.pad(x, ((0, 0), (0, 0),
                     (pad, max(0, target_in - L - pad))))[:, :, :target_in]
    xph = xp.reshape(N, C_in, L_out_p, s)[..., phases]    # (N,C_in,L_out_p,P)
    X2 = jnp.transpose(xph, (3, 1, 0, 2)).reshape(R, Mp)
    X2 = jnp.pad(X2, ((0, 0), (0, Mp_pad - Mp + HB)))     # tile + halo padding

    kernel = functools.partial(_rep_block_kernel, offsets=tuple(offs))
    flops = 2 * n_off * C_out * R * Mp_pad
    bytes_acc = 4 * (X2.size + C_out * Mp_pad + w_stack.size + C_out)

    out2d = pl.pallas_call(
        kernel,
        out_shape=jax.ShapeDtypeStruct((C_out, Mp_pad), jnp.float32),
        grid=(num_tiles,),
        in_specs=[
            pl.BlockSpec((n_off, C_out, R), lambda j: (0, 0, 0)),   # resident
            pl.BlockSpec((C_out, 1), lambda j: (0, 0)),             # resident
            pl.BlockSpec((R, TL), lambda j: (0, j)),                # main tile
            pl.BlockSpec((R, HB), lambda j: (0, (j + 1) * (TL // HB))),  # halo
        ],
        out_specs=pl.BlockSpec((C_out, TL), lambda j: (0, j)),      # lane-dense
        compiler_params=pltpu.CompilerParams(
            dimension_semantics=("parallel",)),
        cost_estimate=pl.CostEstimate(flops=flops, transcendentals=0,
                                      bytes_accessed=bytes_acc),
    )(w_stack, b_eq, X2, X2)

    # --- un-fuse batch and drop padding (fused by XLA under the outer jit) --
    out = out2d[:, :Mp].reshape(C_out, N, L_out_p)
    out = jnp.transpose(out, (1, 0, 2))[:, :, :L_out]
    return out


# ---------------------------- RepMTCN wrapper ------------------------------

def init_repmtcn_params(key, in_channels, internal_and_out_channels,
                        prime_kernel_size=3):
    params = []
    c_in = in_channels
    for i, c_out in enumerate(internal_and_out_channels):
        k0, k1, k2, k3, key = jax.random.split(key, 5)
        scale_p = 1.0 / np.sqrt(c_in * prime_kernel_size)
        scale_1 = 1.0 / np.sqrt(c_in)
        params.append(dict(
            w_prime=(jax.random.normal(k0, (c_out, c_in, prime_kernel_size),
                                       jnp.float32) * scale_p),
            b_prime=(jax.random.normal(k1, (c_out,), jnp.float32) * scale_p),
            w_1x1=(jax.random.normal(k2, (c_out, c_in, 1),
                                     jnp.float32) * scale_1),
            b_1x1=(jax.random.normal(k3, (c_out,), jnp.float32) * scale_1),
            dilation=2 ** i,
            stride=i + 1,
        ))
        c_in = c_out
    return params


def repmtcn_forward(x, params):
    for p in params:
        x = rep_block_pallas(x, p["w_prime"], p["b_prime"],
                             p["w_1x1"], p["b_1x1"],
                             dilation=p["dilation"], stride=p["stride"])
    return x


# ------------------------- pure-JAX reference ------------------------------

def _conv1d_ref(x, w, b, stride, dilation, pad):
    N, C_in, L = x.shape
    C_out, _, K = w.shape
    xp = jnp.pad(x, ((0, 0), (0, 0), (pad, pad)))
    Lp = L + 2 * pad
    L_out = (Lp - dilation * (K - 1) - 1) // stride + 1
    out = jnp.zeros((N, C_out, L_out), jnp.float32)
    for k in range(K):
        xs = xp[:, :, k * dilation: k * dilation + (L_out - 1) * stride + 1: stride]
        out = out + jnp.einsum("oc,ncl->nol", w[:, :, k], xs)
    return out + b[None, :, None]


def repmtcn_ref(x, params, prime_kernel_size=3):
    for p in params:
        pad = p["dilation"] * (prime_kernel_size - 1) // 2
        y = _conv1d_ref(x, p["w_prime"], p["b_prime"],
                        p["stride"], p["dilation"], pad)
        y = y + _conv1d_ref(x, p["w_1x1"], p["b_1x1"], p["stride"], 1, 0)
        x = jnp.maximum(y, 0.0)
    return x


# --------------------------------- main ------------------------------------

if __name__ == "__main__":
    key = jax.random.PRNGKey(0)
    kx, kp = jax.random.split(key)

    N, C_in, L = 2, 4, 16
    internal_and_out_channels = [8, 8, 8]
    prime_kernel_size = 3

    x = jax.random.normal(kx, (N, C_in, L), jnp.float32)
    params = init_repmtcn_params(kp, C_in, internal_and_out_channels,
                                 prime_kernel_size)

    fwd = jax.jit(lambda inp: repmtcn_forward(inp, params))
    out = jax.block_until_ready(fwd(x))

    ref = jax.block_until_ready(repmtcn_ref(x, params, prime_kernel_size))
    np.testing.assert_allclose(np.asarray(out), np.asarray(ref),
                               rtol=1e-4, atol=1e-5)

    print("KERNEL_OK")
</pallas_src>

<mosaic_0001>
module attributes {stable_mosaic.version = 11 : i64} {
  func.func @_rep_block_kernel(%arg0: i32, %arg1: memref<3x8x4xf32, #tpu.memory_space<vmem>>, %arg2: memref<8x1xf32, #tpu.memory_space<vmem>>, %arg3: memref<4x256xf32, #tpu.memory_space<vmem>>, %arg4: memref<4x128xf32, #tpu.memory_space<vmem>>, %arg5: memref<8x256xf32, #tpu.memory_space<vmem>>) attributes {dimension_semantics = [#tpu.dimension_semantics<parallel>], iteration_bounds = array<i64: 1>, scalar_prefetch = 0 : i64, scratch_operands = 0 : i64, tpu.core_type = #tpu.core_type<tc>, window_params = [{pipeline_mode = #tpu.pipeline_mode<synchronous>, transform_indices = @transform_0, window_bounds = array<i64: 3, 8, 4>}, {pipeline_mode = #tpu.pipeline_mode<synchronous>, transform_indices = @transform_1, window_bounds = array<i64: 8, 1>}, {transform_indices = @transform_2, window_bounds = array<i64: 4, 256>}, {transform_indices = @transform_3, window_bounds = array<i64: 4, 128>}, {transform_indices = @transform_4, window_bounds = array<i64: 8, 256>}]} {
    %c0 = arith.constant 0 : index
    %c0_0 = arith.constant 0 : index
    %0 = vector.load %arg3[%c0, %c0_0] : memref<4x256xf32, #tpu.memory_space<vmem>>, vector<4x256xf32>
    %c0_1 = arith.constant 0 : index
    %c0_2 = arith.constant 0 : index
    %1 = vector.load %arg4[%c0_1, %c0_2] : memref<4x128xf32, #tpu.memory_space<vmem>>, vector<4x128xf32>
    %2 = tpu.concatenate %0, %1 in 1 : vector<4x256xf32>, vector<4x128xf32> -> vector<4x384xf32>
    %3 = vector.extract_strided_slice %2 {offsets = [0, 0], sizes = [4, 256], strides = [1, 1]} : vector<4x384xf32> to vector<4x256xf32>
    %c0_3 = arith.constant 0 : index
    %c0_4 = arith.constant 0 : index
    %c0_5 = arith.constant 0 : index
    %4 = vector.load %arg1[%c0_3, %c0_4, %c0_5] : memref<3x8x4xf32, #tpu.memory_space<vmem>>, vector<1x8x4xf32>
    %5 = vector.shape_cast %4 : vector<1x8x4xf32> to vector<8x4xf32>
    %cst = arith.constant dense<0.000000e+00> : vector<8x256xf32>
    %6 = tpu.matmul %5, %3, %cst {dimension_numbers = #tpu.dot_dimension_numbers<[1], [0], [0], [1], [0, 0, 1, 1], [], []>} : vector<8x4xf32>, vector<4x256xf32>, vector<8x256xf32> -> vector<8x256xf32>
    %7 = vector.extract_strided_slice %2 {offsets = [0, 1], sizes = [4, 256], strides = [1, 1]} : vector<4x384xf32> to vector<4x256xf32>
    %c1 = arith.constant 1 : index
    %c0_6 = arith.constant 0 : index
    %c0_7 = arith.constant 0 : index
    %8 = vector.load %arg1[%c1, %c0_6, %c0_7] : memref<3x8x4xf32, #tpu.memory_space<vmem>>, vector<1x8x4xf32>
    %9 = vector.shape_cast %8 : vector<1x8x4xf32> to vector<8x4xf32>
    %cst_8 = arith.constant dense<0.000000e+00> : vector<8x256xf32>
    %10 = tpu.matmul %9, %7, %cst_8 {dimension_numbers = #tpu.dot_dimension_numbers<[1], [0], [0], [1], [0, 0, 1, 1], [], []>} : vector<8x4xf32>, vector<4x256xf32>, vector<8x256xf32> -> vector<8x256xf32>
    %11 = arith.addf %6, %10 : vector<8x256xf32>
    %12 = vector.extract_strided_slice %2 {offsets = [0, 2], sizes = [4, 256], strides = [1, 1]} : vector<4x384xf32> to vector<4x256xf32>
    %c2 = arith.constant 2 : index
    %c0_9 = arith.constant 0 : index
    %c0_10 = arith.constant 0 : index
    %13 = vector.load %arg1[%c2, %c0_9, %c0_10] : memref<3x8x4xf32, #tpu.memory_space<vmem>>, vector<1x8x4xf32>
    %14 = vector.shape_cast %13 : vector<1x8x4xf32> to vector<8x4xf32>
    %cst_11 = arith.constant dense<0.000000e+00> : vector<8x256xf32>
    %15 = tpu.matmul %14, %12, %cst_11 {dimension_numbers = #tpu.dot_dimension_numbers<[1], [0], [0], [1], [0, 0, 1, 1], [], []>} : vector<8x4xf32>, vector<4x256xf32>, vector<8x256xf32> -> vector<8x256xf32>
    %16 = arith.addf %11, %15 : vector<8x256xf32>
    %c0_12 = arith.constant 0 : index
    %c0_13 = arith.constant 0 : index
    %17 = vector.load %arg2[%c0_12, %c0_13] : memref<8x1xf32, #tpu.memory_space<vmem>>, vector<8x1xf32>
    %18 = vector.broadcast %17 : vector<8x1xf32> to vector<8x256xf32>
    %19 = arith.addf %16, %18 : vector<8x256xf32>
    %cst_14 = arith.constant 0.000000e+00 : f32
    %20 = vector.broadcast %cst_14 : f32 to vector<8x256xf32>
    %21 = arith.maximumf %19, %20 : vector<8x256xf32>
    %c0_15 = arith.constant 0 : index
    %c0_16 = arith.constant 0 : index
    %22 = vector.load %arg5[%c0_15, %c0_16] : memref<8x256xf32, #tpu.memory_space<vmem>>, vector<8x256xf32>
    tpu.vector_store %arg5[%c0_15, %c0_16], %21 {strides = array<i32>} : memref<8x256xf32, #tpu.memory_space<vmem>>, vector<8x256xf32>,
    return
  }
  func.func @transform_0(%arg0: i32) -> (i32, i32, i32) {
    %c0_i32 = arith.constant 0 : i32
    %c0_i32_0 = arith.constant 0 : i32
    %c0_i32_1 = arith.constant 0 : i32
    %c0_i32_2 = arith.constant 0 : i32
    return %c0_i32, %c0_i32_0, %c0_i32_1 : i32, i32, i32
  }
  func.func @transform_1(%arg0: i32) -> (i32, i32) {
    %c0_i32 = arith.constant 0 : i32
    %c0_i32_0 = arith.constant 0 : i32
    %c0_i32_1 = arith.constant 0 : i32
    return %c0_i32, %c0_i32_0 : i32, i32
  }
  func.func @transform_2(%arg0: i32) -> (i32, i32) {
    %c0_i32 = arith.constant 0 : i32
    %c0_i32_0 = arith.constant 0 : i32
    return %c0_i32, %arg0 : i32, i32
  }
  func.func @transform_3(%arg0: i32) -> (i32, i32) {
    %c1_i32 = arith.constant 1 : i32
    %0 = arith.addi %arg0, %c1_i32 : i32
    %c2_i32 = arith.constant 2 : i32
    %1 = arith.muli %0, %c2_i32 : i32
    %c0_i32 = arith.constant 0 : i32
    %c0_i32_0 = arith.constant 0 : i32
    return %c0_i32, %1 : i32, i32
  }
  func.func @transform_4(%arg0: i32) -> (i32, i32) {
    %c0_i32 = arith.constant 0 : i32
    %c0_i32_0 = arith.constant 0 : i32
    return %c0_i32, %arg0 : i32, i32
  }
}

module attributes {stable_mosaic.version = 11 : i64} {
  func.func @_rep_block_kernel(%arg0: i32, %arg1: memref<3x8x8xf32, #tpu.memory_space<vmem>>, %arg2: memref<8x1xf32, #tpu.memory_space<vmem>>, %arg3: memref<8x256xf32, #tpu.memory_space<vmem>>, %arg4: memref<8x128xf32, #tpu.memory_space<vmem>>, %arg5: memref<8x256xf32, #tpu.memory_space<vmem>>) attributes {dimension_semantics = [#tpu.dimension_semantics<parallel>], iteration_bounds = array<i64: 1>, scalar_prefetch = 0 : i64, scratch_operands = 0 : i64, tpu.core_type = #tpu.core_type<tc>, window_params = [{pipeline_mode = #tpu.pipeline_mode<synchronous>, transform_indices = @transform_0, window_bounds = array<i64: 3, 8, 8>}, {pipeline_mode = #tpu.pipeline_mode<synchronous>, transform_indices = @transform_1, window_bounds = array<i64: 8, 1>}, {transform_indices = @transform_2, window_bounds = array<i64: 8, 256>}, {transform_indices = @transform_3, window_bounds = array<i64: 8, 128>}, {transform_indices = @transform_4, window_bounds = array<i64: 8, 256>}]} {
    %c0 = arith.constant 0 : index
    %c0_0 = arith.constant 0 : index
    %0 = vector.load %arg3[%c0, %c0_0] : memref<8x256xf32, #tpu.memory_space<vmem>>, vector<8x256xf32>
    %c0_1 = arith.constant 0 : index
    %c0_2 = arith.constant 0 : index
    %1 = vector.load %arg4[%c0_1, %c0_2] : memref<8x128xf32, #tpu.memory_space<vmem>>, vector<8x128xf32>
    %2 = tpu.concatenate %0, %1 in 1 : vector<8x256xf32>, vector<8x128xf32> -> vector<8x384xf32>
    %3 = vector.extract_strided_slice %2 {offsets = [0, 0], sizes = [8, 256], strides = [1, 1]} : vector<8x384xf32> to vector<8x256xf32>
    %c0_3 = arith.constant 0 : index
    %c0_4 = arith.constant 0 : index
    %c0_5 = arith.constant 0 : index
    %4 = vector.load %arg1[%c0_3, %c0_4, %c0_5] : memref<3x8x8xf32, #tpu.memory_space<vmem>>, vector<1x8x8xf32>
    %5 = vector.shape_cast %4 : vector<1x8x8xf32> to vector<8x8xf32>
    %cst = arith.constant dense<0.000000e+00> : vector<8x256xf32>
    %6 = tpu.matmul %5, %3, %cst {dimension_numbers = #tpu.dot_dimension_numbers<[1], [0], [0], [1], [0, 0, 1, 1], [], []>} : vector<8x8xf32>, vector<8x256xf32>, vector<8x256xf32> -> vector<8x256xf32>
    %7 = vector.extract_strided_slice %2 {offsets = [0, 1], sizes = [8, 256], strides = [1, 1]} : vector<8x384xf32> to vector<8x256xf32>
    %c1 = arith.constant 1 : index
    %c0_6 = arith.constant 0 : index
    %c0_7 = arith.constant 0 : index
    %8 = vector.load %arg1[%c1, %c0_6, %c0_7] : memref<3x8x8xf32, #tpu.memory_space<vmem>>, vector<1x8x8xf32>
    %9 = vector.shape_cast %8 : vector<1x8x8xf32> to vector<8x8xf32>
    %cst_8 = arith.constant dense<0.000000e+00> : vector<8x256xf32>
    %10 = tpu.matmul %9, %7, %cst_8 {dimension_numbers = #tpu.dot_dimension_numbers<[1], [0], [0], [1], [0, 0, 1, 1], [], []>} : vector<8x8xf32>, vector<8x256xf32>, vector<8x256xf32> -> vector<8x256xf32>
    %11 = arith.addf %6, %10 : vector<8x256xf32>
    %12 = vector.extract_strided_slice %2 {offsets = [0, 2], sizes = [8, 256], strides = [1, 1]} : vector<8x384xf32> to vector<8x256xf32>
    %c2 = arith.constant 2 : index
    %c0_9 = arith.constant 0 : index
    %c0_10 = arith.constant 0 : index
    %13 = vector.load %arg1[%c2, %c0_9, %c0_10] : memref<3x8x8xf32, #tpu.memory_space<vmem>>, vector<1x8x8xf32>
    %14 = vector.shape_cast %13 : vector<1x8x8xf32> to vector<8x8xf32>
    %cst_11 = arith.constant dense<0.000000e+00> : vector<8x256xf32>
    %15 = tpu.matmul %14, %12, %cst_11 {dimension_numbers = #tpu.dot_dimension_numbers<[1], [0], [0], [1], [0, 0, 1, 1], [], []>} : vector<8x8xf32>, vector<8x256xf32>, vector<8x256xf32> -> vector<8x256xf32>
    %16 = arith.addf %11, %15 : vector<8x256xf32>
    %c0_12 = arith.constant 0 : index
    %c0_13 = arith.constant 0 : index
    %17 = vector.load %arg2[%c0_12, %c0_13] : memref<8x1xf32, #tpu.memory_space<vmem>>, vector<8x1xf32>
    %18 = vector.broadcast %17 : vector<8x1xf32> to vector<8x256xf32>
    %19 = arith.addf %16, %18 : vector<8x256xf32>
    %cst_14 = arith.constant 0.000000e+00 : f32
    %20 = vector.broadcast %cst_14 : f32 to vector<8x256xf32>
    %21 = arith.maximumf %19, %20 : vector<8x256xf32>
    %c0_15 = arith.constant 0 : index
    %c0_16 = arith.constant 0 : index
    %22 = vector.load %arg5[%c0_15, %c0_16] : memref<8x256xf32, #tpu.memory_space<vmem>>, vector<8x256xf32>
    tpu.vector_store %arg5[%c0_15, %c0_16], %21 {strides = array<i32>} : memref<8x256xf32, #tpu.memory_space<vmem>>, vector<8x256xf32>,
    return
  }
  func.func @transform_0(%arg0: i32) -> (i32, i32, i32) {
    %c0_i32 = arith.constant 0 : i32
    %c0_i32_0 = arith.constant 0 : i32
    %c0_i32_1 = arith.constant 0 : i32
    %c0_i32_2 = arith.constant 0 : i32
    return %c0_i32, %c0_i32_0, %c0_i32_1 : i32, i32, i32
  }
  func.func @transform_1(%arg0: i32) -> (i32, i32) {
    %c0_i32 = arith.constant 0 : i32
    %c0_i32_0 = arith.constant 0 : i32
    %c0_i32_1 = arith.constant 0 : i32
    return %c0_i32, %c0_i32_0 : i32, i32
  }
  func.func @transform_2(%arg0: i32) -> (i32, i32) {
    %c0_i32 = arith.constant 0 : i32
    %c0_i32_0 = arith.constant 0 : i32
    return %c0_i32, %arg0 : i32, i32
  }
  func.func @transform_3(%arg0: i32) -> (i32, i32) {
    %c1_i32 = arith.constant 1 : i32
    %0 = arith.addi %arg0, %c1_i32 : i32
    %c2_i32 = arith.constant 2 : i32
    %1 = arith.muli %0, %c2_i32 : i32
    %c0_i32 = arith.constant 0 : i32
    %c0_i32_0 = arith.constant 0 : i32
    return %c0_i32, %1 : i32, i32
  }
  func.func @transform_4(%arg0: i32) -> (i32, i32) {
    %c0_i32 = arith.constant 0 : i32
    %c0_i32_0 = arith.constant 0 : i32
    return %c0_i32, %arg0 : i32, i32
  }
}

module attributes {stable_mosaic.version = 11 : i64} {
  func.func @_rep_block_kernel(%arg0: i32, %arg1: memref<3x8x24xf32, #tpu.memory_space<vmem>>, %arg2: memref<8x1xf32, #tpu.memory_space<vmem>>, %arg3: memref<24x256xf32, #tpu.memory_space<vmem>>, %arg4: memref<24x128xf32, #tpu.memory_space<vmem>>, %arg5: memref<8x256xf32, #tpu.memory_space<vmem>>) attributes {dimension_semantics = [#tpu.dimension_semantics<parallel>], iteration_bounds = array<i64: 1>, scalar_prefetch = 0 : i64, scratch_operands = 0 : i64, tpu.core_type = #tpu.core_type<tc>, window_params = [{pipeline_mode = #tpu.pipeline_mode<synchronous>, transform_indices = @transform_0, window_bounds = array<i64: 3, 8, 24>}, {pipeline_mode = #tpu.pipeline_mode<synchronous>, transform_indices = @transform_1, window_bounds = array<i64: 8, 1>}, {transform_indices = @transform_2, window_bounds = array<i64: 24, 256>}, {transform_indices = @transform_3, window_bounds = array<i64: 24, 128>}, {transform_indices = @transform_4, window_bounds = array<i64: 8, 256>}]} {
    %c0 = arith.constant 0 : index
    %c0_0 = arith.constant 0 : index
    %0 = vector.load %arg3[%c0, %c0_0] : memref<24x256xf32, #tpu.memory_space<vmem>>, vector<24x256xf32>
    %c0_1 = arith.constant 0 : index
    %c0_2 = arith.constant 0 : index
    %1 = vector.load %arg4[%c0_1, %c0_2] : memref<24x128xf32, #tpu.memory_space<vmem>>, vector<24x128xf32>
    %2 = tpu.concatenate %0, %1 in 1 : vector<24x256xf32>, vector<24x128xf32> -> vector<24x384xf32>
    %3 = vector.extract_strided_slice %2 {offsets = [0, 0], sizes = [24, 256], strides = [1, 1]} : vector<24x384xf32> to vector<24x256xf32>
    %c0_3 = arith.constant 0 : index
    %c0_4 = arith.constant 0 : index
    %c0_5 = arith.constant 0 : index
    %4 = vector.load %arg1[%c0_3, %c0_4, %c0_5] : memref<3x8x24xf32, #tpu.memory_space<vmem>>, vector<1x8x24xf32>
    %5 = vector.shape_cast %4 : vector<1x8x24xf32> to vector<8x24xf32>
    %cst = arith.constant dense<0.000000e+00> : vector<8x256xf32>
    %6 = tpu.matmul %5, %3, %cst {dimension_numbers = #tpu.dot_dimension_numbers<[1], [0], [0], [1], [0, 0, 1, 1], [], []>} : vector<8x24xf32>, vector<24x256xf32>, vector<8x256xf32> -> vector<8x256xf32>
    %7 = vector.extract_strided_slice %2 {offsets = [0, 1], sizes = [24, 256], strides = [1, 1]} : vector<24x384xf32> to vector<24x256xf32>
    %c1 = arith.constant 1 : index
    %c0_6 = arith.constant 0 : index
    %c0_7 = arith.constant 0 : index
    %8 = vector.load %arg1[%c1, %c0_6, %c0_7] : memref<3x8x24xf32, #tpu.memory_space<vmem>>, vector<1x8x24xf32>
    %9 = vector.shape_cast %8 : vector<1x8x24xf32> to vector<8x24xf32>
    %cst_8 = arith.constant dense<0.000000e+00> : vector<8x256xf32>
    %10 = tpu.matmul %9, %7, %cst_8 {dimension_numbers = #tpu.dot_dimension_numbers<[1], [0], [0], [1], [0, 0, 1, 1], [], []>} : vector<8x24xf32>, vector<24x256xf32>, vector<8x256xf32> -> vector<8x256xf32>
    %11 = arith.addf %6, %10 : vector<8x256xf32>
    %12 = vector.extract_strided_slice %2 {offsets = [0, 2], sizes = [24, 256], strides = [1, 1]} : vector<24x384xf32> to vector<24x256xf32>
    %c2 = arith.constant 2 : index
    %c0_9 = arith.constant 0 : index
    %c0_10 = arith.constant 0 : index
    %13 = vector.load %arg1[%c2, %c0_9, %c0_10] : memref<3x8x24xf32, #tpu.memory_space<vmem>>, vector<1x8x24xf32>
    %14 = vector.shape_cast %13 : vector<1x8x24xf32> to vector<8x24xf32>
    %cst_11 = arith.constant dense<0.000000e+00> : vector<8x256xf32>
    %15 = tpu.matmul %14, %12, %cst_11 {dimension_numbers = #tpu.dot_dimension_numbers<[1], [0], [0], [1], [0, 0, 1, 1], [], []>} : vector<8x24xf32>, vector<24x256xf32>, vector<8x256xf32> -> vector<8x256xf32>
    %16 = arith.addf %11, %15 : vector<8x256xf32>
    %c0_12 = arith.constant 0 : index
    %c0_13 = arith.constant 0 : index
    %17 = vector.load %arg2[%c0_12, %c0_13] : memref<8x1xf32, #tpu.memory_space<vmem>>, vector<8x1xf32>
    %18 = vector.broadcast %17 : vector<8x1xf32> to vector<8x256xf32>
    %19 = arith.addf %16, %18 : vector<8x256xf32>
    %cst_14 = arith.constant 0.000000e+00 : f32
    %20 = vector.broadcast %cst_14 : f32 to vector<8x256xf32>
    %21 = arith.maximumf %19, %20 : vector<8x256xf32>
    %c0_15 = arith.constant 0 : index
    %c0_16 = arith.constant 0 : index
    %22 = vector.load %arg5[%c0_15, %c0_16] : memref<8x256xf32, #tpu.memory_space<vmem>>, vector<8x256xf32>
    tpu.vector_store %arg5[%c0_15, %c0_16], %21 {strides = array<i32>} : memref<8x256xf32, #tpu.memory_space<vmem>>, vector<8x256xf32>,
    return
  }
  func.func @transform_0(%arg0: i32) -> (i32, i32, i32) {
    %c0_i32 = arith.constant 0 : i32
    %c0_i32_0 = arith.constant 0 : i32
    %c0_i32_1 = arith.constant 0 : i32
    %c0_i32_2 = arith.constant 0 : i32
    return %c0_i32, %c0_i32_0, %c0_i32_1 : i32, i32, i32
  }
  func.func @transform_1(%arg0: i32) -> (i32, i32) {
    %c0_i32 = arith.constant 0 : i32
    %c0_i32_0 = arith.constant 0 : i32
    %c0_i32_1 = arith.constant 0 : i32
    return %c0_i32, %c0_i32_0 : i32, i32
  }
  func.func @transform_2(%arg0: i32) -> (i32, i32) {
    %c0_i32 = arith.constant 0 : i32
    %c0_i32_0 = arith.constant 0 : i32
    return %c0_i32, %arg0 : i32, i32
  }
  func.func @transform_3(%arg0: i32) -> (i32, i32) {
    %c1_i32 = arith.constant 1 : i32
    %0 = arith.addi %arg0, %c1_i32 : i32
    %c2_i32 = arith.constant 2 : i32
    %1 = arith.muli %0, %c2_i32 : i32
    %c0_i32 = arith.constant 0 : i32
    %c0_i32_0 = arith.constant 0 : i32
    return %c0_i32, %1 : i32, i32
  }
  func.func @transform_4(%arg0: i32) -> (i32, i32) {
    %c0_i32 = arith.constant 0 : i32
    %c0_i32_0 = arith.constant 0 : i32
    return %c0_i32, %arg0 : i32, i32
  }
}

</mosaic_0001>

<llo_original>
// kernel: _lambda_.3
$region0: #{_lambda_.3}
  #allocation0 [shape = 'u32[]', space=smem, size = 0x4, offset = 0x4, fixed_abs, tag = 'smem constant byte address 0x4 - core index']
  #allocation1 [shape = 'u32[72,128]{1,0:T(1,128)}', space=vmem, size = 0x9000, scoped, tag = 'internal scratch']
  %s0 = inlined_call_operand.vmem [shape: f32[3,8,4], index: 0, kind: input, shape index: {}]
  %s1 = inlined_call_operand.vmem [shape: f32[8,1], index: 1, kind: input, shape index: {}]
  %s2 = inlined_call_operand.vmem [shape: f32[4,384], index: 2, kind: input, shape index: {}, may-alias: {2,3}]
  %s3 = inlined_call_operand.vmem [shape: f32[4,384], index: 3, kind: input, shape index: {}, may-alias: {2,3}]
  %s4 = inlined_call_operand.vmem [shape: f32[8,256], index: 4, kind: output, shape index: {}]
  %s5 = sld [smem:[#allocation0]]
  $region26: #{_lambda_.3} parent=0
    _
  %s7 = ssub.s32 1, %s5
  %s8 = scalar_select 0, %s7, %s5
  // Predicated region
  $region2: #{_lambda_.3} parent=0 // pred_check
    _
  $region3: #{_lambda_.3} parent=0 // pred_check_branch
    %10 = sbr.rel (0) target = $region5
  $region4: #{_lambda_.3} parent=0 // pred_region
    _
  $region5: #{_lambda_.3} parent=0 // pred_fallthru
    _
  // Predicated region
  $region6: #{_lambda_.3} parent=0 // pred_check
    _
  $region7: #{_lambda_.3} parent=0 // pred_check_branch
    %12 = sbr.rel (0) target = $region9
  $region8: #{_lambda_.3} parent=0 // pred_region
    _
  $region9: #{_lambda_.3} parent=0 // pred_fallthru
    _
  // Predicated region
  $region10: #{_lambda_.3} parent=0 // pred_check
    _
  $region11: #{_lambda_.3} parent=0 // pred_check_branch
    %14 = sbr.rel (0) target = $region13
  $region12: #{_lambda_.3} parent=0 // pred_region
    _
  $region13: #{_lambda_.3} parent=0 // pred_fallthru
    _
  // Predicated region
  $region14: #{_lambda_.3} parent=0 // pred_check
    _
  $region15: #{_lambda_.3} parent=0 // pred_check_branch
    %16 = sbr.rel (0) target = $region17
  $region16: #{_lambda_.3} parent=0 // pred_region
    %s17 = sadd.s32 0, 1
    %s18 = smul.u32 %s17, 2
    %p19 = scmp.lt.s32.totalorder %s18, 2
    %s20 = scalar_select %p19, %s18, 2
    %s21 = smul.addr %s20, 4
    %s22 = scalar_lea.vmem %s3, %s21
    %s23 = sadd.s32 0, 1
    %s24 = smul.u32 %s23, 2
  $region17: #{_lambda_.3} parent=0 // pred_fallthru
    _
  %s25 = sadd.s32 0, 1
  %s26 = smul.u32 %s25, 2
  %p27 = scmp.lt.s32.totalorder %s26, 2
  %s28 = scalar_select %p27, %s26, 2
  %s29 = smul.addr %s28, 4
  %s30 = scalar_lea.vmem %s3, %s29
  %s31 = sadd.s32 0, 1
  %s32 = smul.u32 %s31, 2
  %p33 = scmp.lt.s32.totalorder %s32, 2
  %s34 = scalar_select %p33, %s32, 2
  %s35 = smul.addr %s34, 4
  %s36 = scalar_lea.vmem %s3, %s35
  %s37 = sadd.s32 0, 1
  %s38 = smul.u32 %s37, 2
  %v39 = vld [vmem:[%s2] sm:$0xff]
  %v40 = vld [vmem:[%s36] sm:$0xf]
  %42 = vst [vmem:[#allocation1] ss:$2 sm:$0xff] %v39
  %v43 = vld.sshfl [vmem:[#allocation1] sm:$0xff pattern:$0x75316420]
  %v44 = vld.sshfl [vmem:[#allocation1 + $0x8] sm:$0xff pattern:$0x75316420]
  %v45 = vld [vmem:[%s0] sm:$0xff]
  %s46 = scalar_lea.vmem %s0, 8
  %v47 = vld [vmem:[%s46] sm:$0xff]
  %49 = vrot.lane.b32.xlu0 %v43, 127
  %v50 = vpop.permute.xlu0 %49
  %51 = vrot.lane.b32.xlu0 %v44, 127
  %v52 = vpop.permute.xlu0 %51
  %53 = vrot.lane.b32.xlu0 %v40, 127
  %v54 = vpop.permute.xlu0 %53
  %vm55 = vcmask 1039360
  %v56 = vsel %vm55, %v50, %v52
  %v57 = vsel %vm55, %v52, %v54
  %vm58 = vcmask 31744
  %v60 = vsel %vm58, %v47, 0
  %vm62 = vcmask 1043456
  %v63 = vsel %vm62, %v56, 0
  %v65 = vsel %vm62, %v57, 0
  %67 = vmatpush.msra.mxu0 0.0
  %68 = vmatpush.msra.mxu0 0.0
  %69 = vmatpush.msra.mxu0 0.0
  %70 = vmatpush.msra.mxu0 0.0
  %71 = vmatpush.msra.mxu0 0.0
  %72 = vmatpush.msra.mxu0 0.0
  %73 = vmatpush.msra.mxu0 0.0
  %74 = vmatpush.msra.mxu0 0.0
  %75 = vmatpush.msra.mxu0 0.0
  %76 = vmatpush.msra.mxu0 0.0
  %77 = vmatpush.msra.mxu0 0.0
  %78 = vmatpush.msra.mxu0 0.0
  %79 = vmatpush.msra.mxu0 0.0
  %80 = vmatpush.msra.mxu0 0.0
  %81 = vmatpush.msra.mxu0 0.0
  %82 = vmatpush.msra.mxu0 %v63
  %83 = vmatmul.f32.gmra.mxu0 %v60
  %v84 = vpop.f32.mrf.mxu0
  %v85 = vadd.f32 0.0, %v84
  %86 = vdwg.mxu0
  %87 = vmatpush.msra.mxu0 0.0
  %88 = vmatpush.msra.mxu0 0.0
  %89 = vmatpush.msra.mxu0 0.0
  %90 = vmatpush.msra.mxu0 0.0
  %91 = vmatpush.msra.mxu0 0.0
  %92 = vmatpush.msra.mxu0 0.0
  %93 = vmatpush.msra.mxu0 0.0
  %94 = vmatpush.msra.mxu0 0.0
  %95 = vmatpush.msra.mxu0 0.0
  %96 = vmatpush.msra.mxu0 0.0
  %97 = vmatpush.msra.mxu0 0.0
  %98 = vmatpush.msra.mxu0 0.0
  %99 = vmatpush.msra.mxu0 0.0
  %100 = vmatpush.msra.mxu0 0.0
  %101 = vmatpush.msra.mxu0 0.0
  %102 = vmatpush.msra.mxu0 %v65
  %103 = vmatmul.f32.gmra.mxu0 %v60
  %v104 = vpop.f32.mrf.mxu0
  %v105 = vadd.f32 0.0, %v104
  %106 = vdwg.mxu0
  %v108 = vsel %vm58, %v45, 0
  %v110 = vsel %vm62, %v43, 0
  %v112 = vsel %vm62, %v44, 0
  %114 = vmatpush.msra.mxu0 0.0
  %115 = vmatpush.msra.mxu0 0.0
  %116 = vmatpush.msra.mxu0 0.0
  %117 = vmatpush.msra.mxu0 0.0
  %118 = vmatpush.msra.mxu0 0.0
  %119 = vmatpush.msra.mxu0 0.0
  %120 = vmatpush.msra.mxu0 0.0
  %121 = vmatpush.msra.mxu0 0.0
  %122 = vmatpush.msra.mxu0 0.0
  %123 = vmatpush.msra.mxu0 0.0
  %124 = vmatpush.msra.mxu0 0.0
  %125 = vmatpush.msra.mxu0 0.0
  %126 = vmatpush.msra.mxu0 0.0
  %127 = vmatpush.msra.mxu0 0.0
  %128 = vmatpush.msra.mxu0 0.0
  %129 = vmatpush.msra.mxu0 %v110
  %130 = vmatmul.f32.gmra.mxu0 %v108
  %v131 = vpop.f32.mrf.mxu0
  %v132 = vadd.f32 %v85, %v131
  %133 = vdwg.mxu0
  %134 = vmatpush.msra.mxu0 0.0
  %135 = vmatpush.msra.mxu0 0.0
  %136 = vmatpush.msra.mxu0 0.0
  %137 = vmatpush.msra.mxu0 0.0
  %138 = vmatpush.msra.mxu0 0.0
  %139 = vmatpush.msra.mxu0 0.0
  %140 = vmatpush.msra.mxu0 0.0
  %141 = vmatpush.msra.mxu0 0.0
  %142 = vmatpush.msra.mxu0 0.0
  %143 = vmatpush.msra.mxu0 0.0
  %144 = vmatpush.msra.mxu0 0.0
  %145 = vmatpush.msra.mxu0 0.0
  %146 = vmatpush.msra.mxu0 0.0
  %147 = vmatpush.msra.mxu0 0.0
  %148 = vmatpush.msra.mxu0 0.0
  %149 = vmatpush.msra.mxu0 %v112
  %150 = vmatmul.f32.gmra.mxu0 %v108
  %v151 = vpop.f32.mrf.mxu0
  %v152 = vadd.f32 %v105, %v151
  %153 = vdwg.mxu0
  %s154 = scalar_lea.vmem %s0, 16
  %v155 = vld [vmem:[%s154] sm:$0xff]
  %156 = vrot.lane.b32.xlu0 %v43, 126
  %v157 = vpop.permute.xlu0 %156
  %158 = vrot.lane.b32.xlu0 %v44, 126
  %v159 = vpop.permute.xlu0 %158
  %160 = vrot.lane.b32.xlu0 %v40, 126
  %v161 = vpop.permute.xlu0 %160
  %vm162 = vcmask 1031168
  %v163 = vsel %vm162, %v157, %v159
  %v164 = vsel %vm162, %v159, %v161
  %v166 = vsel %vm58, %v155, 0
  %v168 = vsel %vm62, %v163, 0
  %v170 = vsel %vm62, %v164, 0
  %172 = vmatpush.msra.mxu0 0.0
  %173 = vmatpush.msra.mxu0 0.0
  %174 = vmatpush.msra.mxu0 0.0
  %175 = vmatpush.msra.mxu0 0.0
  %176 = vmatpush.msra.mxu0 0.0
  %177 = vmatpush.msra.mxu0 0.0
  %178 = vmatpush.msra.mxu0 0.0
  %179 = vmatpush.msra.mxu0 0.0
  %180 = vmatpush.msra.mxu0 0.0
  %181 = vmatpush.msra.mxu0 0.0
  %182 = vmatpush.msra.mxu0 0.0
  %183 = vmatpush.msra.mxu0 0.0
  %184 = vmatpush.msra.mxu0 0.0
  %185 = vmatpush.msra.mxu0 0.0
  %186 = vmatpush.msra.mxu0 0.0
  %187 = vmatpush.msra.mxu0 %v168
  %188 = vmatmul.f32.gmra.mxu0 %v166
  %v189 = vpop.f32.mrf.mxu0
  %v190 = vadd.f32 0.0, %v189
  %191 = vdwg.mxu0
  %192 = vmatpush.msra.mxu0 0.0
  %193 = vmatpush.msra.mxu0 0.0
  %194 = vmatpush.msra.mxu0 0.0
  %195 = vmatpush.msra.mxu0 0.0
  %196 = vmatpush.msra.mxu0 0.0
  %197 = vmatpush.msra.mxu0 0.0
  %198 = vmatpush.msra.mxu0 0.0
  %199 = vmatpush.msra.mxu0 0.0
  %200 = vmatpush.msra.mxu0 0.0
  %201 = vmatpush.msra.mxu0 0.0
  %202 = vmatpush.msra.mxu0 0.0
  %203 = vmatpush.msra.mxu0 0.0
  %204 = vmatpush.msra.mxu0 0.0
  %205 = vmatpush.msra.mxu0 0.0
  %206 = vmatpush.msra.mxu0 0.0
  %207 = vmatpush.msra.mxu0 %v170
  %208 = vmatmul.f32.gmra.mxu0 %v166
  %v209 = vpop.f32.mrf.mxu0
  %v210 = vadd.f32 0.0, %v209
  %211 = vdwg.mxu0
  %v212 = vadd.f32 %v132, %v190
  %v213 = vadd.f32 %v152, %v210
  %v214 = vld [vmem:[%s1] sm:$0xff]
  %216 = vset.pattern.permute.xlu0 0
  %217 = vperm.xlu0 %216, %v214
  %v218 = vpop.permute.xlu0 %217
  %v220 = vadd.f32 %v212, %v218
  %v221 = vadd.f32 %v213, %v218
  %v222 = vmax.f32 %v220, 0.0
  %v223 = vmax.f32 %v221, 0.0
  %224 = vst [vmem:[%s4] sm:$0xff] %v222
  %225 = vst [vmem:[%s4 + $0x8] sm:$0xff] %v223
  // Predicated region
  $region18: #{_lambda_.3} parent=0 // pred_check
    _
  $region19: #{_lambda_.3} parent=0 // pred_check_branch
    %227 = sbr.rel (0) target = $region21
  $region20: #{_lambda_.3} parent=0 // pred_region
    _
  $region21: #{_lambda_.3} parent=0 // pred_fallthru
    _
  // Predicated region
  $region22: #{_lambda_.3} parent=0 // pred_check
    _
  $region23: #{_lambda_.3} parent=0 // pred_check_branch
    %229 = sbr.rel (0) target = $region25
  $region24: #{_lambda_.3} parent=0 // pred_region
    _
  $region25: #{_lambda_.3} parent=0 // pred_fallthru
    _

// kernel: _lambda_.4
$region0: #{_lambda_.4}
  #allocation0 [shape = 'u32[]', space=smem, size = 0x4, offset = 0x4, fixed_abs, tag = 'smem constant byte address 0x4 - core index']
  #allocation1 [shape = 'u32[72,128]{1,0:T(1,128)}', space=vmem, size = 0x9000, scoped, tag = 'internal scratch']
  %s0 = inlined_call_operand.vmem [shape: f32[3,8,8], index: 0, kind: input, shape index: {}]
  %s1 = inlined_call_operand.vmem [shape: f32[8,1], index: 1, kind: input, shape index: {}]
  %s2 = inlined_call_operand.vmem [shape: f32[8,384], index: 2, kind: input, shape index: {}, may-alias: {2,3}]
  %s3 = inlined_call_operand.vmem [shape: f32[8,384], index: 3, kind: input, shape index: {}, may-alias: {2,3}]
  %s4 = inlined_call_operand.vmem [shape: f32[8,256], index: 4, kind: output, shape index: {}]
  %s5 = sld [smem:[#allocation0]]
  $region26: #{_lambda_.4} parent=0
    _
  %s7 = ssub.s32 1, %s5
  %s8 = scalar_select 0, %s7, %s5
  // Predicated region
  $region2: #{_lambda_.4} parent=0 // pred_check
    _
  $region3: #{_lambda_.4} parent=0 // pred_check_branch
    %10 = sbr.rel (0) target = $region5
  $region4: #{_lambda_.4} parent=0 // pred_region
    _
  $region5: #{_lambda_.4} parent=0 // pred_fallthru
    _
  // Predicated region
  $region6: #{_lambda_.4} parent=0 // pred_check
    _
  $region7: #{_lambda_.4} parent=0 // pred_check_branch
    %12 = sbr.rel (0) target = $region9
  $region8: #{_lambda_.4} parent=0 // pred_region
    _
  $region9: #{_lambda_.4} parent=0 // pred_fallthru
    _
  // Predicated region
  $region10: #{_lambda_.4} parent=0 // pred_check
    _
  $region11: #{_lambda_.4} parent=0 // pred_check_branch
    %14 = sbr.rel (0) target = $region13
  $region12: #{_lambda_.4} parent=0 // pred_region
    _
  $region13: #{_lambda_.4} parent=0 // pred_fallthru
    _
  // Predicated region
  $region14: #{_lambda_.4} parent=0 // pred_check
    _
  $region15: #{_lambda_.4} parent=0 // pred_check_branch
    %16 = sbr.rel (0) target = $region17
  $region16: #{_lambda_.4} parent=0 // pred_region
    %s17 = sadd.s32 0, 1
    %s18 = smul.u32 %s17, 2
    %p19 = scmp.lt.s32.totalorder %s18, 2
    %s20 = scalar_select %p19, %s18, 2
    %s21 = smul.addr %s20, 8
    %s22 = scalar_lea.vmem %s3, %s21
    %s23 = sadd.s32 0, 1
    %s24 = smul.u32 %s23, 2
  $region17: #{_lambda_.4} parent=0 // pred_fallthru
    _
  %s25 = sadd.s32 0, 1
  %s26 = smul.u32 %s25, 2
  %p27 = scmp.lt.s32.totalorder %s26, 2
  %s28 = scalar_select %p27, %s26, 2
  %s29 = smul.addr %s28, 8
  %s30 = scalar_lea.vmem %s3, %s29
  %s31 = sadd.s32 0, 1
  %s32 = smul.u32 %s31, 2
  %p33 = scmp.lt.s32.totalorder %s32, 2
  %s34 = scalar_select %p33, %s32, 2
  %s35 = smul.addr %s34, 8
  %s36 = scalar_lea.vmem %s3, %s35
  %s37 = sadd.s32 0, 1
  %s38 = smul.u32 %s37, 2
  %v39 = vld [vmem:[%s2] sm:$0xff]
  %v40 = vld [vmem:[%s2 + $0x8] sm:$0xff]
  %v41 = vld [vmem:[%s36] sm:$0xff]
  %v42 = vld [vmem:[%s0] sm:$0xff]
  %s43 = scalar_lea.vmem %s0, 8
  %v44 = vld [vmem:[%s43] sm:$0xff]
  %48 = vrot.lane.b32.xlu0 %v39, 127
  %v49 = vpop.permute.xlu0 %48
  %50 = vrot.lane.b32.xlu0 %v40, 127
  %v51 = vpop.permute.xlu0 %50
  %52 = vrot.lane.b32.xlu0 %v41, 127
  %v53 = vpop.permute.xlu0 %52
  %vm54 = vcmask 1039360
  %v55 = vsel %vm54, %v49, %v51
  %v56 = vsel %vm54, %v51, %v53
  %vm59 = vcmask 64512
  %v61 = vsel %vm59, %v44, 0
  %63 = vmatpush.msra.mxu0 0.0
  %64 = vmatpush.msra.mxu0 0.0
  %65 = vmatpush.msra.mxu0 0.0
  %66 = vmatpush.msra.mxu0 0.0
  %67 = vmatpush.msra.mxu0 0.0
  %68 = vmatpush.msra.mxu0 0.0
  %69 = vmatpush.msra.mxu0 0.0
  %70 = vmatpush.msra.mxu0 0.0
  %71 = vmatpush.msra.mxu0 0.0
  %72 = vmatpush.msra.mxu0 0.0
  %73 = vmatpush.msra.mxu0 0.0
  %74 = vmatpush.msra.mxu0 0.0
  %75 = vmatpush.msra.mxu0 0.0
  %76 = vmatpush.msra.mxu0 0.0
  %77 = vmatpush.msra.mxu0 0.0
  %78 = vmatpush.msra.mxu0 %v55
  %79 = vmatmul.f32.gmra.mxu0 %v61
  %v80 = vpop.f32.mrf.mxu0
  %v81 = vadd.f32 0.0, %v80
  %82 = vdwg.mxu0
  %83 = vmatpush.msra.mxu0 0.0
  %84 = vmatpush.msra.mxu0 0.0
  %85 = vmatpush.msra.mxu0 0.0
  %86 = vmatpush.msra.mxu0 0.0
  %87 = vmatpush.msra.mxu0 0.0
  %88 = vmatpush.msra.mxu0 0.0
  %89 = vmatpush.msra.mxu0 0.0
  %90 = vmatpush.msra.mxu0 0.0
  %91 = vmatpush.msra.mxu0 0.0
  %92 = vmatpush.msra.mxu0 0.0
  %93 = vmatpush.msra.mxu0 0.0
  %94 = vmatpush.msra.mxu0 0.0
  %95 = vmatpush.msra.mxu0 0.0
  %96 = vmatpush.msra.mxu0 0.0
  %97 = vmatpush.msra.mxu0 0.0
  %98 = vmatpush.msra.mxu0 %v56
  %99 = vmatmul.f32.gmra.mxu0 %v61
  %v100 = vpop.f32.mrf.mxu0
  %v101 = vadd.f32 0.0, %v100
  %102 = vdwg.mxu0
  %v104 = vsel %vm59, %v42, 0
  %106 = vmatpush.msra.mxu0 0.0
  %107 = vmatpush.msra.mxu0 0.0
  %108 = vmatpush.msra.mxu0 0.0
  %109 = vmatpush.msra.mxu0 0.0
  %110 = vmatpush.msra.mxu0 0.0
  %111 = vmatpush.msra.mxu0 0.0
  %112 = vmatpush.msra.mxu0 0.0
  %113 = vmatpush.msra.mxu0 0.0
  %114 = vmatpush.msra.mxu0 0.0
  %115 = vmatpush.msra.mxu0 0.0
  %116 = vmatpush.msra.mxu0 0.0
  %117 = vmatpush.msra.mxu0 0.0
  %118 = vmatpush.msra.mxu0 0.0
  %119 = vmatpush.msra.mxu0 0.0
  %120 = vmatpush.msra.mxu0 0.0
  %121 = vmatpush.msra.mxu0 %v39
  %122 = vmatmul.f32.gmra.mxu0 %v104
  %v123 = vpop.f32.mrf.mxu0
  %v124 = vadd.f32 %v81, %v123
  %125 = vdwg.mxu0
  %126 = vmatpush.msra.mxu0 0.0
  %127 = vmatpush.msra.mxu0 0.0
  %128 = vmatpush.msra.mxu0 0.0
  %129 = vmatpush.msra.mxu0 0.0
  %130 = vmatpush.msra.mxu0 0.0
  %131 = vmatpush.msra.mxu0 0.0
  %132 = vmatpush.msra.mxu0 0.0
  %133 = vmatpush.msra.mxu0 0.0
  %134 = vmatpush.msra.mxu0 0.0
  %135 = vmatpush.msra.mxu0 0.0
  %136 = vmatpush.msra.mxu0 0.0
  %137 = vmatpush.msra.mxu0 0.0
  %138 = vmatpush.msra.mxu0 0.0
  %139 = vmatpush.msra.mxu0 0.0
  %140 = vmatpush.msra.mxu0 0.0
  %141 = vmatpush.msra.mxu0 %v40
  %142 = vmatmul.f32.gmra.mxu0 %v104
  %v143 = vpop.f32.mrf.mxu0
  %v144 = vadd.f32 %v101, %v143
  %145 = vdwg.mxu0
  %s146 = scalar_lea.vmem %s0, 16
  %v147 = vld [vmem:[%s146] sm:$0xff]
  %148 = vrot.lane.b32.xlu0 %v39, 126
  %v149 = vpop.permute.xlu0 %148
  %150 = vrot.lane.b32.xlu0 %v40, 126
  %v151 = vpop.permute.xlu0 %150
  %152 = vrot.lane.b32.xlu0 %v41, 126
  %v153 = vpop.permute.xlu0 %152
  %vm154 = vcmask 1031168
  %v155 = vsel %vm154, %v149, %v151
  %v156 = vsel %vm154, %v151, %v153
  %v160 = vsel %vm59, %v147, 0
  %162 = vmatpush.msra.mxu0 0.0
  %163 = vmatpush.msra.mxu0 0.0
  %164 = vmatpush.msra.mxu0 0.0
  %165 = vmatpush.msra.mxu0 0.0
  %166 = vmatpush.msra.mxu0 0.0
  %167 = vmatpush.msra.mxu0 0.0
  %168 = vmatpush.msra.mxu0 0.0
  %169 = vmatpush.msra.mxu0 0.0
  %170 = vmatpush.msra.mxu0 0.0
  %171 = vmatpush.msra.mxu0 0.0
  %172 = vmatpush.msra.mxu0 0.0
  %173 = vmatpush.msra.mxu0 0.0
  %174 = vmatpush.msra.mxu0 0.0
  %175 = vmatpush.msra.mxu0 0.0
  %176 = vmatpush.msra.mxu0 0.0
  %177 = vmatpush.msra.mxu0 %v155
  %178 = vmatmul.f32.gmra.mxu0 %v160
  %v179 = vpop.f32.mrf.mxu0
  %v180 = vadd.f32 0.0, %v179
  %181 = vdwg.mxu0
  %182 = vmatpush.msra.mxu0 0.0
  %183 = vmatpush.msra.mxu0 0.0
  %184 = vmatpush.msra.mxu0 0.0
  %185 = vmatpush.msra.mxu0 0.0
  %186 = vmatpush.msra.mxu0 0.0
  %187 = vmatpush.msra.mxu0 0.0
  %188 = vmatpush.msra.mxu0 0.0
  %189 = vmatpush.msra.mxu0 0.0
  %190 = vmatpush.msra.mxu0 0.0
  %191 = vmatpush.msra.mxu0 0.0
  %192 = vmatpush.msra.mxu0 0.0
  %193 = vmatpush.msra.mxu0 0.0
  %194 = vmatpush.msra.mxu0 0.0
  %195 = vmatpush.msra.mxu0 0.0
  %196 = vmatpush.msra.mxu0 0.0
  %197 = vmatpush.msra.mxu0 %v156
  %198 = vmatmul.f32.gmra.mxu0 %v160
  %v199 = vpop.f32.mrf.mxu0
  %v200 = vadd.f32 0.0, %v199
  %201 = vdwg.mxu0
  %v202 = vadd.f32 %v124, %v180
  %v203 = vadd.f32 %v144, %v200
  %v204 = vld [vmem:[%s1] sm:$0xff]
  %206 = vset.pattern.permute.xlu0 0
  %207 = vperm.xlu0 %206, %v204
  %v208 = vpop.permute.xlu0 %207
  %v210 = vadd.f32 %v202, %v208
  %v211 = vadd.f32 %v203, %v208
  %v212 = vmax.f32 %v210, 0.0
  %v213 = vmax.f32 %v211, 0.0
  %214 = vst [vmem:[%s4] sm:$0xff] %v212
  %215 = vst [vmem:[%s4 + $0x8] sm:$0xff] %v213
  // Predicated region
  $region18: #{_lambda_.4} parent=0 // pred_check
    _
  $region19: #{_lambda_.4} parent=0 // pred_check_branch
    %217 = sbr.rel (0) target = $region21
  $region20: #{_lambda_.4} parent=0 // pred_region
    _
  $region21: #{_lambda_.4} parent=0 // pred_fallthru
    _
  // Predicated region
  $region22: #{_lambda_.4} parent=0 // pred_check
    _
  $region23: #{_lambda_.4} parent=0 // pred_check_branch
    %219 = sbr.rel (0) target = $region25
  $region24: #{_lambda_.4} parent=0 // pred_region
    _
  $region25: #{_lambda_.4} parent=0 // pred_fallthru
    _

// kernel: _lambda_.5
$region0: #{_lambda_.5}
  #allocation0 [shape = 'u32[]', space=smem, size = 0x4, offset = 0x4, fixed_abs, tag = 'smem constant byte address 0x4 - core index']
  #allocation1 [shape = 'u32[72,128]{1,0:T(1,128)}', space=vmem, size = 0x9000, scoped, tag = 'internal scratch']
  %s0 = inlined_call_operand.vmem [shape: f32[3,8,24], index: 0, kind: input, shape index: {}]
  %s1 = inlined_call_operand.vmem [shape: f32[8,1], index: 1, kind: input, shape index: {}]
  %s2 = inlined_call_operand.vmem [shape: f32[24,384], index: 2, kind: input, shape index: {}, may-alias: {2,3}]
  %s3 = inlined_call_operand.vmem [shape: f32[24,384], index: 3, kind: input, shape index: {}, may-alias: {2,3}]
  %s4 = inlined_call_operand.vmem [shape: f32[8,256], index: 4, kind: output, shape index: {}]
  %s5 = sld [smem:[#allocation0]]
  $region87: #{_lambda_.5} parent=0
    _
  %s7 = ssub.s32 1, %s5
  %s8 = scalar_select 0, %s7, %s5
  $region1: #{_lambda_.5} parent=0
    #allocation2 [shape = 'u8[24576]{0}', space=vmem, size = 0x6000, scoped, tag = 'input window, operand 2, single buffered']
    #allocation3 [shape = 'u8[12288]{0}', space=vmem, size = 0x3000, scoped, tag = 'input window, operand 3, single buffered']
    // Predicated region
    $region2: #{_lambda_.5} parent=1 // pred_check
      _
    $region3: #{_lambda_.5} parent=1 // pred_check_branch
      %10 = sbr.rel (0) target = $region5
    $region4: #{_lambda_.5} parent=1 // pred_region
      _
    $region5: #{_lambda_.5} parent=1 // pred_fallthru
      _
    // Predicated region
    $region6: #{_lambda_.5} parent=1 // pred_check
      _
    $region7: #{_lambda_.5} parent=1 // pred_check_branch
      %12 = sbr.rel (0) target = $region9
    $region8: #{_lambda_.5} parent=1 // pred_region
      _
    $region9: #{_lambda_.5} parent=1 // pred_fallthru
      _
    // Predicated region
    $region10: #{_lambda_.5} parent=1 // pred_check
      _
    $region11: #{_lambda_.5} parent=1 // pred_check_branch
      %14 = sbr.rel (0) target = $region13
    $region12: #{_lambda_.5} parent=1 // pred_region
      // Predicated region
      $region14: #{_lambda_.5} parent=12 // pred_check
        _
      $region15: #{_lambda_.5} parent=12 // pred_check_branch
        %16 = sbr.rel (0) target = $region17
      $region16: #{_lambda_.5} parent=12 // pred_region
        // Predicated region
        $region18: #{_lambda_.5} parent=16 // pred_check
          _
        $region19: #{_lambda_.5} parent=16 // pred_check_branch
          %18 = sbr.rel (0) target = $region21
        $region20: #{_lambda_.5} parent=16 // pred_region
          loop: start=0, step=1, limit=1
          $region22: #{_lambda_.5} parent=20 // loop_pre_header
            _
          $region23: #{_lambda_.5} parent=20 // loop_header
            %s20 = sphi 0, %s24
            %p21 = scmp.ge.s32.totalorder %s20, 1
            %s25 = sphi %s2, %s2
            %s26 = sphi [#allocation2], [#allocation2]
          $region24: #{_lambda_.5} parent=20 // loop_header_branch
            %23 = sbr.rel (%p21) target = $region28
          $region25: #{_lambda_.5} parent=20 // loop_body
            %v27 = vld [vmem:[%s25] sm:$0xff]
            %28 = vst [vmem:[%s26] sm:$0xff] %v27
            %v29 = vld [vmem:[%s25 + $0x8] sm:$0xff]
            %30 = vst [vmem:[%s26 + $0x8] sm:$0xff] %v29
            %v31 = vld [vmem:[%s25 + $0x18] sm:$0xff]
            %32 = vst [vmem:[%s26 + $0x10] sm:$0xff] %v31
            %v33 = vld [vmem:[%s25 + $0x20] sm:$0xff]
            %34 = vst [vmem:[%s26 + $0x18] sm:$0xff] %v33
            %v35 = vld [vmem:[%s25 + $0x30] sm:$0xff]
            %36 = vst [vmem:[%s26 + $0x20] sm:$0xff] %v35
            %v37 = vld [vmem:[%s25 + $0x38] sm:$0xff]
            %38 = vst [vmem:[%s26 + $0x28] sm:$0xff] %v37
          $region26: #{_lambda_.5} parent=20 // loop_footer
            %s24 = sadd.s32 1, %s20
          $region27: #{_lambda_.5} parent=20 // loop_footer_branch
            %19 = sbr.rel target = $region23
          $region28: #{_lambda_.5} parent=20 // loop_exit
            _
        $region21: #{_lambda_.5} parent=16 // pred_fallthru
          _
        // Predicated region
        $region29: #{_lambda_.5} parent=16 // pred_check
          _
        $region30: #{_lambda_.5} parent=16 // pred_check_branch
          %40 = sbr.rel target = $region32
        $region31: #{_lambda_.5} parent=16 // pred_region
          _
        $region32: #{_lambda_.5} parent=16 // pred_fallthru
          _
      $region17: #{_lambda_.5} parent=12 // pred_fallthru
        _
      %41 = vnop
    $region13: #{_lambda_.5} parent=1 // pred_fallthru
      _
    // Predicated region
    $region33: #{_lambda_.5} parent=1 // pred_check
      _
    $region34: #{_lambda_.5} parent=1 // pred_check_branch
      %43 = sbr.rel (0) target = $region36
    $region35: #{_lambda_.5} parent=1 // pred_region
      %s44 = sadd.s32 0, 1
      %s45 = smul.u32 %s44, 2
      %s46 = smul.addr %s45, 8
      %s47 = scalar_lea.vmem %s3, %s46
      // Predicated region
      $region37: #{_lambda_.5} parent=35 // pred_check
        _
      $region38: #{_lambda_.5} parent=35 // pred_check_branch
        %49 = sbr.rel (0) target = $region40
      $region39: #{_lambda_.5} parent=35 // pred_region
        // Predicated region
        $region41: #{_lambda_.5} parent=39 // pred_check
          _
        $region42: #{_lambda_.5} parent=39 // pred_check_branch
          %51 = sbr.rel (0) target = $region44
        $region43: #{_lambda_.5} parent=39 // pred_region
          // Predicated region
          $region56: #{_lambda_.5} parent=43 // pred_check
            _
          $region57: #{_lambda_.5} parent=43 // pred_check_branch
            %71 = sbr.rel (0) target = $region59
          $region58: #{_lambda_.5} parent=43 // pred_region
            loop: start=0, step=1, limit=1
            $region60: #{_lambda_.5} parent=58 // loop_pre_header
              _
            $region61: #{_lambda_.5} parent=58 // loop_header
              %s73 = sphi 0, %s77
              %p74 = scmp.ge.s32.totalorder %s73, 1
              %s78 = sphi %s47, %s47
              %s79 = sphi [#allocation3], [#allocation3]
            $region62: #{_lambda_.5} parent=58 // loop_header_branch
              %76 = sbr.rel (%p74) target = $region66
            $region63: #{_lambda_.5} parent=58 // loop_body
              %v80 = vld [vmem:[%s78] sm:$0xff]
              %81 = vst [vmem:[%s79] sm:$0xff] %v80
              %v82 = vld [vmem:[%s78 + $0x18] sm:$0xff]
              %83 = vst [vmem:[%s79 + $0x8] sm:$0xff] %v82
              %v84 = vld [vmem:[%s78 + $0x30] sm:$0xff]
              %85 = vst [vmem:[%s79 + $0x10] sm:$0xff] %v84
            $region64: #{_lambda_.5} parent=58 // loop_footer
              %s77 = sadd.s32 1, %s73
            $region65: #{_lambda_.5} parent=58 // loop_footer_branch
              %72 = sbr.rel target = $region61
            $region66: #{_lambda_.5} parent=58 // loop_exit
              _
          $region59: #{_lambda_.5} parent=43 // pred_fallthru
            _
          // Predicated region
          $region67: #{_lambda_.5} parent=43 // pred_check
            _
          $region68: #{_lambda_.5} parent=43 // pred_check_branch
            %87 = sbr.rel target = $region70
          $region69: #{_lambda_.5} parent=43 // pred_region
            _
          $region70: #{_lambda_.5} parent=43 // pred_fallthru
            _
        $region44: #{_lambda_.5} parent=39 // pred_fallthru
          _
        // Predicated region
        $region45: #{_lambda_.5} parent=39 // pred_check
          _
        $region46: #{_lambda_.5} parent=39 // pred_check_branch
          %53 = sbr.rel target = $region48
        $region47: #{_lambda_.5} parent=39 // pred_region
          %s55 = ssub.s32 256, 1
          loop: start=0, step=1, limit=1
          $region49: #{_lambda_.5} parent=47 // loop_pre_header
            _
          $region50: #{_lambda_.5} parent=47 // loop_header
            %s57 = sphi 0, %s61
            %p58 = scmp.ge.s32.totalorder %s57, 1
            %s62 = sphi %s47, %s47
            %s63 = sphi [#allocation3], [#allocation3]
          $region51: #{_lambda_.5} parent=47 // loop_header_branch
            %60 = sbr.rel (%p58) target = $region55
          $region52: #{_lambda_.5} parent=47 // loop_body
            %v64 = vld [vmem:[%s62] sm:%s55]
            %65 = vst [vmem:[%s63] sm:%s55] %v64
            %v66 = vld [vmem:[%s62 + $0x18] sm:%s55]
            %67 = vst [vmem:[%s63 + $0x8] sm:%s55] %v66
            %v68 = vld [vmem:[%s62 + $0x30] sm:%s55]
            %69 = vst [vmem:[%s63 + $0x10] sm:%s55] %v68
          $region53: #{_lambda_.5} parent=47 // loop_footer
            %s61 = sadd.s32 1, %s57
          $region54: #{_lambda_.5} parent=47 // loop_footer_branch
            %56 = sbr.rel target = $region50
          $region55: #{_lambda_.5} parent=47 // loop_exit
            _
        $region48: #{_lambda_.5} parent=39 // pred_fallthru
          _
      $region40: #{_lambda_.5} parent=35 // pred_fallthru
        _
      %88 = vnop
    $region36: #{_lambda_.5} parent=1 // pred_fallthru
      _
    // Predicated region
    $region71: #{_lambda_.5} parent=1 // pred_check
      _
    $region72: #{_lambda_.5} parent=1 // pred_check_branch
      %90 = sbr.rel (0) target = $region74
    $region73: #{_lambda_.5} parent=1 // pred_region
      _
    $region74: #{_lambda_.5} parent=1 // pred_fallthru
      _
    // Predicated region
    $region75: #{_lambda_.5} parent=1 // pred_check
      _
    $region76: #{_lambda_.5} parent=1 // pred_check_branch
      %92 = sbr.rel (0) target = $region78
    $region77: #{_lambda_.5} parent=1 // pred_region
      _
    $region78: #{_lambda_.5} parent=1 // pred_fallthru
      _
    %s93 = sadd.s32 0, 1
    %s94 = smul.u32 %s93, 2
    %v95 = vld [vmem:[#allocation2] sm:$0xff]
    %v96 = vld [vmem:[#allocation2 + $0x8] sm:$0xff]
    %v97 = vld [vmem:[#allocation2 + $0x10] sm:$0xff]
    %v98 = vld [vmem:[#allocation2 + $0x18] sm:$0xff]
    %v99 = vld [vmem:[#allocation2 + $0x20] sm:$0xff]
    %v100 = vld [vmem:[#allocation2 + $0x28] sm:$0xff]
    %v101 = vld [vmem:[#allocation3] sm:$0xff]
    %v102 = vld [vmem:[#allocation3 + $0x8] sm:$0xff]
    %v103 = vld [vmem:[#allocation3 + $0x10] sm:$0xff]
    %v104 = vld [vmem:[%s0] sm:$0xff]
    %s105 = scalar_lea.vmem %s0, 8
    %v106 = vld [vmem:[%s105] sm:$0xff]
    %116 = vrot.lane.b32.xlu0 %v95, 127
    %v117 = vpop.permute.xlu0 %116
    %118 = vrot.lane.b32.xlu0 %v96, 127
    %v119 = vpop.permute.xlu0 %118
    %120 = vrot.lane.b32.xlu0 %v101, 127
    %v121 = vpop.permute.xlu0 %120
    %122 = vrot.lane.b32.xlu0 %v97, 127
    %v123 = vpop.permute.xlu0 %122
    %124 = vrot.lane.b32.xlu0 %v98, 127
    %v125 = vpop.permute.xlu0 %124
    %126 = vrot.lane.b32.xlu0 %v102, 127
    %v127 = vpop.permute.xlu0 %126
    %128 = vrot.lane.b32.xlu0 %v99, 127
    %v129 = vpop.permute.xlu0 %128
    %130 = vrot.lane.b32.xlu0 %v100, 127
    %v131 = vpop.permute.xlu0 %130
    %132 = vrot.lane.b32.xlu0 %v103, 127
    %v133 = vpop.permute.xlu0 %132
    %vm134 = vcmask 1039360
    %v135 = vsel %vm134, %v117, %v119
    %v136 = vsel %vm134, %v119, %v121
    %v137 = vsel %vm134, %v123, %v125
    %v138 = vsel %vm134, %v125, %v127
    %v139 = vsel %vm134, %v129, %v131
    %v140 = vsel %vm134, %v131, %v133
    %vm147 = vcmask 195584
    %v149 = vsel %vm147, %v106, 0
    %151 = vmatpush.msra.mxu0 0.0
    %152 = vmatpush.msra.mxu0 0.0
    %153 = vmatpush.msra.mxu0 0.0
    %154 = vmatpush.msra.mxu0 0.0
    %155 = vmatpush.msra.mxu0 0.0
    %156 = vmatpush.msra.mxu0 0.0
    %157 = vmatpush.msra.mxu0 0.0
    %158 = vmatpush.msra.mxu0 0.0
    %159 = vmatpush.msra.mxu0 0.0
    %160 = vmatpush.msra.mxu0 0.0
    %161 = vmatpush.msra.mxu0 0.0
    %162 = vmatpush.msra.mxu0 0.0
    %163 = vmatpush.msra.mxu0 0.0
    %164 = vmatpush.msra.mxu0 %v139
    %165 = vmatpush.msra.mxu0 %v137
    %166 = vmatpush.msra.mxu0 %v135
    %167 = vmatmul.f32.gmra.mxu0 %v149
    %v168 = vpop.f32.mrf.mxu0
    %v169 = vadd.f32 0.0, %v168
    %170 = vdwg.mxu0
    %171 = vmatpush.msra.mxu0 0.0
    %172 = vmatpush.msra.mxu0 0.0
    %173 = vmatpush.msra.mxu0 0.0
    %174 = vmatpush.msra.mxu0 0.0
    %175 = vmatpush.msra.mxu0 0.0
    %176 = vmatpush.msra.mxu0 0.0
    %177 = vmatpush.msra.mxu0 0.0
    %178 = vmatpush.msra.mxu0 0.0
    %179 = vmatpush.msra.mxu0 0.0
    %180 = vmatpush.msra.mxu0 0.0
    %181 = vmatpush.msra.mxu0 0.0
    %182 = vmatpush.msra.mxu0 0.0
    %183 = vmatpush.msra.mxu0 0.0
    %184 = vmatpush.msra.mxu0 %v140
    %185 = vmatpush.msra.mxu0 %v138
    %186 = vmatpush.msra.mxu0 %v136
    %187 = vmatmul.f32.gmra.mxu0 %v149
    %v188 = vpop.f32.mrf.mxu0
    %v189 = vadd.f32 0.0, %v188
    %190 = vdwg.mxu0
    %v192 = vsel %vm147, %v104, 0
    %194 = vmatpush.msra.mxu0 0.0
    %195 = vmatpush.msra.mxu0 0.0
    %196 = vmatpush.msra.mxu0 0.0
    %197 = vmatpush.msra.mxu0 0.0
    %198 = vmatpush.msra.mxu0 0.0
    %199 = vmatpush.msra.mxu0 0.0
    %200 = vmatpush.msra.mxu0 0.0
    %201 = vmatpush.msra.mxu0 0.0
    %202 = vmatpush.msra.mxu0 0.0
    %203 = vmatpush.msra.mxu0 0.0
    %204 = vmatpush.msra.mxu0 0.0
    %205 = vmatpush.msra.mxu0 0.0
    %206 = vmatpush.msra.mxu0 0.0
    %207 = vmatpush.msra.mxu0 %v99
    %208 = vmatpush.msra.mxu0 %v97
    %209 = vmatpush.msra.mxu0 %v95
    %210 = vmatmul.f32.gmra.mxu0 %v192
    %v211 = vpop.f32.mrf.mxu0
    %v212 = vadd.f32 %v169, %v211
    %213 = vdwg.mxu0
    %214 = vmatpush.msra.mxu0 0.0
    %215 = vmatpush.msra.mxu0 0.0
    %216 = vmatpush.msra.mxu0 0.0
    %217 = vmatpush.msra.mxu0 0.0
    %218 = vmatpush.msra.mxu0 0.0
    %219 = vmatpush.msra.mxu0 0.0
    %220 = vmatpush.msra.mxu0 0.0
    %221 = vmatpush.msra.mxu0 0.0
    %222 = vmatpush.msra.mxu0 0.0
    %223 = vmatpush.msra.mxu0 0.0
    %224 = vmatpush.msra.mxu0 0.0
    %225 = vmatpush.msra.mxu0 0.0
    %226 = vmatpush.msra.mxu0 0.0
    %227 = vmatpush.msra.mxu0 %v100
    %228 = vmatpush.msra.mxu0 %v98
    %229 = vmatpush.msra.mxu0 %v96
    %230 = vmatmul.f32.gmra.mxu0 %v192
    %v231 = vpop.f32.mrf.mxu0
    %v232 = vadd.f32 %v189, %v231
    %233 = vdwg.mxu0
    %s234 = scalar_lea.vmem %s0, 16
    %v235 = vld [vmem:[%s234] sm:$0xff]
    %236 = vrot.lane.b32.xlu0 %v95, 126
    %v237 = vpop.permute.xlu0 %236
    %238 = vrot.lane.b32.xlu0 %v96, 126
    %v239 = vpop.permute.xlu0 %238
    %240 = vrot.lane.b32.xlu0 %v101, 126
    %v241 = vpop.permute.xlu0 %240
    %242 = vrot.lane.b32.xlu0 %v97, 126
    %v243 = vpop.permute.xlu0 %242
    %244 = vrot.lane.b32.xlu0 %v98, 126
    %v245 = vpop.permute.xlu0 %244
    %246 = vrot.lane.b32.xlu0 %v102, 126
    %v247 = vpop.permute.xlu0 %246
    %248 = vrot.lane.b32.xlu0 %v99, 126
    %v249 = vpop.permute.xlu0 %248
    %250 = vrot.lane.b32.xlu0 %v100, 126
    %v251 = vpop.permute.xlu0 %250
    %252 = vrot.lane.b32.xlu0 %v103, 126
    %v253 = vpop.permute.xlu0 %252
    %vm254 = vcmask 1031168
    %v255 = vsel %vm254, %v237, %v239
    %v256 = vsel %vm254, %v239, %v241
    %v257 = vsel %vm254, %v243, %v245
    %v258 = vsel %vm254, %v245, %v247
    %v259 = vsel %vm254, %v249, %v251
    %v260 = vsel %vm254, %v251, %v253
    %v268 = vsel %vm147, %v235, 0
    %270 = vmatpush.msra.mxu0 0.0
    %271 = vmatpush.msra.mxu0 0.0
    %272 = vmatpush.msra.mxu0 0.0
    %273 = vmatpush.msra.mxu0 0.0
    %274 = vmatpush.msra.mxu0 0.0
    %275 = vmatpush.msra.mxu0 0.0
    %276 = vmatpush.msra.mxu0 0.0
    %277 = vmatpush.msra.mxu0 0.0
    %278 = vmatpush.msra.mxu0 0.0
    %279 = vmatpush.msra.mxu0 0.0
    %280 = vmatpush.msra.mxu0 0.0
    %281 = vmatpush.msra.mxu0 0.0
    %282 = vmatpush.msra.mxu0 0.0
    %283 = vmatpush.msra.mxu0 %v259
    %284 = vmatpush.msra.mxu0 %v257
    %285 = vmatpush.msra.mxu0 %v255
    %286 = vmatmul.f32.gmra.mxu0 %v268
    %v287 = vpop.f32.mrf.mxu0
    %v288 = vadd.f32 0.0, %v287
    %289 = vdwg.mxu0
    %290 = vmatpush.msra.mxu0 0.0
    %291 = vmatpush.msra.mxu0 0.0
    %292 = vmatpush.msra.mxu0 0.0
    %293 = vmatpush.msra.mxu0 0.0
    %294 = vmatpush.msra.mxu0 0.0
    %295 = vmatpush.msra.mxu0 0.0
    %296 = vmatpush.msra.mxu0 0.0
    %297 = vmatpush.msra.mxu0 0.0
    %298 = vmatpush.msra.mxu0 0.0
    %299 = vmatpush.msra.mxu0 0.0
    %300 = vmatpush.msra.mxu0 0.0
    %301 = vmatpush.msra.mxu0 0.0
    %302 = vmatpush.msra.mxu0 0.0
    %303 = vmatpush.msra.mxu0 %v260
    %304 = vmatpush.msra.mxu0 %v258
    %305 = vmatpush.msra.mxu0 %v256
    %306 = vmatmul.f32.gmra.mxu0 %v268
    %v307 = vpop.f32.mrf.mxu0
    %v308 = vadd.f32 0.0, %v307
    %309 = vdwg.mxu0
    %v310 = vadd.f32 %v212, %v288
    %v311 = vadd.f32 %v232, %v308
    %v312 = vld [vmem:[%s1] sm:$0xff]
    %314 = vset.pattern.permute.xlu0 0
    %315 = vperm.xlu0 %314, %v312
    %v316 = vpop.permute.xlu0 %315
    %v318 = vadd.f32 %v310, %v316
    %v319 = vadd.f32 %v311, %v316
    %v320 = vmax.f32 %v318, 0.0
    %v321 = vmax.f32 %v319, 0.0
    %322 = vst [vmem:[%s4] sm:$0xff] %v320
    %323 = vst [vmem:[%s4 + $0x8] sm:$0xff] %v321
    // Predicated region
    $region79: #{_lambda_.5} parent=1 // pred_check
      _
    $region80: #{_lambda_.5} parent=1 // pred_check_branch
      %325 = sbr.rel (0) target = $region82
    $region81: #{_lambda_.5} parent=1 // pred_region
      _
    $region82: #{_lambda_.5} parent=1 // pred_fallthru
      _
    // Predicated region
    $region83: #{_lambda_.5} parent=1 // pred_check
      _
    $region84: #{_lambda_.5} parent=1 // pred_check_branch
      %327 = sbr.rel (0) target = $region86
    $region85: #{_lambda_.5} parent=1 // pred_region
      _
    $region86: #{_lambda_.5} parent=1 // pred_fallthru
      _

</llo_original>
